<compile_context>
chip_gen: v7x
topology: tpu7x:2x2x1
jax: 0.10.0
libtpu: 0.0.40
codegen_flags: <defaults>
</compile_context>

<pallas_src>
import functools

import jax
import jax.numpy as jnp
from jax.experimental import pallas as pl
from jax.experimental.pallas import tpu as pltpu

NUM_INPUT = 28 * 28      # 784
NUM_HIDDEN = 100
NUM_CLASS = 10

K_PAD = 896              # 7 * 128, padded contraction dim
H_PAD = 128              # padded hidden dim
C_PAD = 128              # padded output (lane-dense stores), sliced to 10 outside


def _round_up(n, m):
    return (n + m - 1) // m * m


def _mlp_kernel(x_ref, w1_ref, b1_ref, w2_ref, b2_ref, o_ref):
    # Layer 1: (TB, 896) @ (896, 128), bf16 inputs, f32 MXU accumulation.
    h = jnp.dot(x_ref[...], w1_ref[...], preferred_element_type=jnp.float32)
    h = jnp.maximum(h + b1_ref[...], 0.0)            # bias + ReLU, lane-dense (H=128)
    # TODO(synk): training-mode Dropout(p=0.5) would need pltpu.prng_seed /
    # pltpu.prng_random_bits and 1/(1-p) scaling; eval-mode dropout is identity.
    # Layer 2: (TB, 128) @ (128, 128), bf16 inputs, f32 accumulation.
    out = jnp.dot(h.astype(w2_ref.dtype), w2_ref[...],
                  preferred_element_type=jnp.float32)
    o_ref[...] = (out + b2_ref[...]).astype(o_ref.dtype)


def prepare_params(w1, b1, w2, b2):
    """One-time parameter prep (NOT in the per-call forward path):
    transpose PyTorch (out,in) -> (in,out), zero-pad to lane-aligned shapes,
    cast weights to bf16 (biases stay f32). Zero padding is exact:
    padded K rows / hidden columns contribute 0 through matmul+ReLU."""
    H, K = w1.shape
    C = w2.shape[0]
    w1_t = (jnp.zeros((K_PAD, H_PAD), jnp.float32)
            .at[:K, :H].set(w1.T).astype(jnp.bfloat16))
    b1_p = jnp.zeros((1, H_PAD), jnp.float32).at[0, :H].set(b1)
    w2_t = (jnp.zeros((H_PAD, C_PAD), jnp.float32)
            .at[:H, :C].set(w2.T).astype(jnp.bfloat16))
    b2_p = jnp.zeros((1, C_PAD), jnp.float32).at[0, :C].set(b2)
    return w1_t, b1_p, w2_t, b2_p


@functools.partial(jax.jit, static_argnames=("block_b",))
def mlp_forward(x, w1_t, b1_p, w2_t, b2_p, *, block_b=256):
    """x: (B, 1, 28, 28) or (B, 784) float32. Returns (B, NUM_CLASS) float32."""
    x2d = x.reshape(-1, NUM_INPUT)                   # == input.view(-1, num_input)
    B = x2d.shape[0]

    # Batch tile: multiple of 8 sublanes, capped at block_b (VMEM-safe on v7x:
    # 2 bufs * 256*896*2B for x ~= 0.9 MiB, resident weights ~0.25 MiB bf16).
    TB = min(block_b, _round_up(B, 8))
    B_pad = _round_up(B, TB)

    # Pad batch + contraction dim with zeros, cast activations to bf16.
    xp = (jnp.zeros((B_pad, K_PAD), jnp.float32)
          .at[:B, :NUM_INPUT].set(x2d).astype(jnp.bfloat16))

    cost = pl.CostEstimate(
        flops=2 * B_pad * K_PAD * H_PAD + 2 * B_pad * H_PAD * C_PAD,
        transcendentals=0,
        bytes_accessed=(xp.size * 2 + w1_t.size * 2 + w2_t.size * 2
                        + b1_p.size * 4 + b2_p.size * 4 + B_pad * C_PAD * 4),
    )

    out_pad = pl.pallas_call(
        _mlp_kernel,
        out_shape=jax.ShapeDtypeStruct((B_pad, C_PAD), jnp.float32),
        grid=(B_pad // TB,),
        in_specs=[
            pl.BlockSpec((TB, K_PAD), lambda i: (i, 0)),      # x: tiled over batch
            pl.BlockSpec((K_PAD, H_PAD), lambda i: (0, 0)),   # W1: resident
            pl.BlockSpec((1, H_PAD), lambda i: (0, 0)),       # b1: resident
            pl.BlockSpec((H_PAD, C_PAD), lambda i: (0, 0)),   # W2: resident
            pl.BlockSpec((1, C_PAD), lambda i: (0, 0)),       # b2: resident
        ],
        out_specs=pl.BlockSpec((TB, C_PAD), lambda i: (i, 0)),
        compiler_params=pltpu.CompilerParams(
            dimension_semantics=("parallel",)),               # v7x: 2 TCs share batch
        cost_estimate=cost,
    )(xp, w1_t, b1_p, w2_t, b2_p)

    return out_pad[:B, :NUM_CLASS]


def init_params(key, num_input=NUM_INPUT, num_hidden=NUM_HIDDEN, num_class=NUM_CLASS):
    """PyTorch nn.Linear default init: U(-1/sqrt(fan_in), 1/sqrt(fan_in))."""
    k1, k2, k3, k4 = jax.random.split(key, 4)
    bound1 = 1.0 / jnp.sqrt(num_input)
    bound2 = 1.0 / jnp.sqrt(num_hidden)
    w1 = jax.random.uniform(k1, (num_hidden, num_input), jnp.float32, -bound1, bound1)
    b1 = jax.random.uniform(k2, (num_hidden,), jnp.float32, -bound1, bound1)
    w2 = jax.random.uniform(k3, (num_class, num_hidden), jnp.float32, -bound2, bound2)
    b2 = jax.random.uniform(k4, (num_class,), jnp.float32, -bound2, bound2)
    return w1, b1, w2, b2


if __name__ == "__main__":
    key = jax.random.PRNGKey(0)
    kx, kp = jax.random.split(key)

    B = 8
    x = jax.random.normal(kx, (B, 1, 28, 28), jnp.float32)
    w1, b1, w2, b2 = init_params(kp)

    # One-time param prep (transpose/pad/bf16) — outside the forward path.
    params = prepare_params(w1, b1, w2, b2)

    out = mlp_forward(x, *params, block_b=256)
    out = jax.block_until_ready(out)
    assert out.shape == (B, NUM_CLASS)

    # Reference in plain JAX with the same bf16 rounding of activations/weights
    # (f32 accumulation), so it matches the kernel's numerics tightly.
    hp = jax.lax.Precision.HIGHEST
    xb = x.reshape(-1, NUM_INPUT).astype(jnp.bfloat16).astype(jnp.float32)
    w1b = w1.astype(jnp.bfloat16).astype(jnp.float32)
    w2b = w2.astype(jnp.bfloat16).astype(jnp.float32)
    h_ref = jnp.maximum(jnp.matmul(xb, w1b.T, precision=hp) + b1, 0.0)
    h_ref = h_ref.astype(jnp.bfloat16).astype(jnp.float32)
    ref = jnp.matmul(h_ref, w2b.T, precision=hp) + b2

    assert jnp.allclose(out, ref, atol=1e-3, rtol=1e-3), (
        float(jnp.max(jnp.abs(out - ref))))

    print("KERNEL_OK")
</pallas_src>

<mosaic_0001>
module attributes {stable_mosaic.version = 11 : i64} {
  func.func @_mlp_kernel(%arg0: i32, %arg1: memref<8x896xbf16, #tpu.memory_space<vmem>>, %arg2: memref<896x128xbf16, #tpu.memory_space<vmem>>, %arg3: memref<1x128xf32, #tpu.memory_space<vmem>>, %arg4: memref<128x128xbf16, #tpu.memory_space<vmem>>, %arg5: memref<1x128xf32, #tpu.memory_space<vmem>>, %arg6: memref<8x128xf32, #tpu.memory_space<vmem>>) attributes {dimension_semantics = [#tpu.dimension_semantics<parallel>], iteration_bounds = array<i64: 1>, scalar_prefetch = 0 : i64, scratch_operands = 0 : i64, tpu.core_type = #tpu.core_type<tc>, window_params = [{transform_indices = @transform_0, window_bounds = array<i64: 8, 896>}, {pipeline_mode = #tpu.pipeline_mode<synchronous>, transform_indices = @transform_1, window_bounds = array<i64: 896, 128>}, {pipeline_mode = #tpu.pipeline_mode<synchronous>, transform_indices = @transform_2, window_bounds = array<i64: 1, 128>}, {pipeline_mode = #tpu.pipeline_mode<synchronous>, transform_indices = @transform_3, window_bounds = array<i64: 128, 128>}, {pipeline_mode = #tpu.pipeline_mode<synchronous>, transform_indices = @transform_4, window_bounds = array<i64: 1, 128>}, {transform_indices = @transform_5, window_bounds = array<i64: 8, 128>}]} {
    %c0 = arith.constant 0 : index
    %c0_0 = arith.constant 0 : index
    %0 = vector.load %arg1[%c0, %c0_0] : memref<8x896xbf16, #tpu.memory_space<vmem>>, vector<8x896xbf16>
    %c0_1 = arith.constant 0 : index
    %c0_2 = arith.constant 0 : index
    %1 = vector.load %arg2[%c0_1, %c0_2] : memref<896x128xbf16, #tpu.memory_space<vmem>>, vector<896x128xbf16>
    %cst = arith.constant dense<0.000000e+00> : vector<8x128xf32>
    %2 = tpu.matmul %0, %1, %cst {dimension_numbers = #tpu.dot_dimension_numbers<[1], [0], [0], [1], [0, 0, 1, 1], [], []>} : vector<8x896xbf16>, vector<896x128xbf16>, vector<8x128xf32> -> vector<8x128xf32>
    %c0_3 = arith.constant 0 : index
    %c0_4 = arith.constant 0 : index
    %3 = vector.load %arg3[%c0_3, %c0_4] : memref<1x128xf32, #tpu.memory_space<vmem>>, vector<1x128xf32>
    %4 = vector.broadcast %3 : vector<1x128xf32> to vector<8x128xf32>
    %5 = arith.addf %2, %4 : vector<8x128xf32>
    %cst_5 = arith.constant 0.000000e+00 : f32
    %6 = vector.broadcast %cst_5 : f32 to vector<8x128xf32>
    %7 = arith.maximumf %5, %6 : vector<8x128xf32>
    %8 = arith.truncf %7 : vector<8x128xf32> to vector<8x128xbf16>
    %c0_6 = arith.constant 0 : index
    %c0_7 = arith.constant 0 : index
    %9 = vector.load %arg4[%c0_6, %c0_7] : memref<128x128xbf16, #tpu.memory_space<vmem>>, vector<128x128xbf16>
    %cst_8 = arith.constant dense<0.000000e+00> : vector<8x128xf32>
    %10 = tpu.matmul %8, %9, %cst_8 {dimension_numbers = #tpu.dot_dimension_numbers<[1], [0], [0], [1], [0, 0, 1, 1], [], []>} : vector<8x128xbf16>, vector<128x128xbf16>, vector<8x128xf32> -> vector<8x128xf32>
    %c0_9 = arith.constant 0 : index
    %c0_10 = arith.constant 0 : index
    %11 = vector.load %arg5[%c0_9, %c0_10] : memref<1x128xf32, #tpu.memory_space<vmem>>, vector<1x128xf32>
    %12 = vector.broadcast %11 : vector<1x128xf32> to vector<8x128xf32>
    %13 = arith.addf %10, %12 : vector<8x128xf32>
    %c0_11 = arith.constant 0 : index
    %c0_12 = arith.constant 0 : index
    %14 = vector.load %arg6[%c0_11, %c0_12] : memref<8x128xf32, #tpu.memory_space<vmem>>, vector<8x128xf32>
    tpu.vector_store %arg6[%c0_11, %c0_12], %13 {strides = array<i32>} : memref<8x128xf32, #tpu.memory_space<vmem>>, vector<8x128xf32>,
    return
  }
  func.func @transform_0(%arg0: i32) -> (i32, i32) {
    %c0_i32 = arith.constant 0 : i32
    %c0_i32_0 = arith.constant 0 : i32
    return %arg0, %c0_i32 : i32, i32
  }
  func.func @transform_1(%arg0: i32) -> (i32, i32) {
    %c0_i32 = arith.constant 0 : i32
    %c0_i32_0 = arith.constant 0 : i32
    %c0_i32_1 = arith.constant 0 : i32
    return %c0_i32, %c0_i32_0 : i32, i32
  }
  func.func @transform_2(%arg0: i32) -> (i32, i32) {
    %c0_i32 = arith.constant 0 : i32
    %c0_i32_0 = arith.constant 0 : i32
    %c0_i32_1 = arith.constant 0 : i32
    return %c0_i32, %c0_i32_0 : i32, i32
  }
  func.func @transform_3(%arg0: i32) -> (i32, i32) {
    %c0_i32 = arith.constant 0 : i32
    %c0_i32_0 = arith.constant 0 : i32
    %c0_i32_1 = arith.constant 0 : i32
    return %c0_i32, %c0_i32_0 : i32, i32
  }
  func.func @transform_4(%arg0: i32) -> (i32, i32) {
    %c0_i32 = arith.constant 0 : i32
    %c0_i32_0 = arith.constant 0 : i32
    %c0_i32_1 = arith.constant 0 : i32
    return %c0_i32, %c0_i32_0 : i32, i32
  }
  func.func @transform_5(%arg0: i32) -> (i32, i32) {
    %c0_i32 = arith.constant 0 : i32
    %c0_i32_0 = arith.constant 0 : i32
    return %arg0, %c0_i32 : i32, i32
  }
}

</mosaic_0001>

<llo_original>
// kernel: mlp_forward.1
$region0: #{mlp_forward.1}
  #allocation0 [shape = 'u32[]', space=smem, size = 0x4, offset = 0x4, fixed_abs, tag = 'smem constant byte address 0x4 - core index']
  #allocation1 [shape = 'u32[144,128]{1,0:T(1,128)}', space=vmem, size = 0x12000, scoped, tag = 'internal scratch']
  %s0 = inlined_call_operand.vmem [shape: bf16[8,896], index: 0, kind: input, shape index: {}]
  %s1 = inlined_call_operand.vmem [shape: bf16[896,128], index: 1, kind: input, shape index: {}]
  %s2 = inlined_call_operand.vmem [shape: f32[1,128], index: 2, kind: input, shape index: {}]
  %s3 = inlined_call_operand.vmem [shape: bf16[128,128], index: 3, kind: input, shape index: {}]
  %s4 = inlined_call_operand.vmem [shape: f32[1,128], index: 4, kind: input, shape index: {}]
  %s5 = inlined_call_operand.hbm [shape: f32[8,128], index: 5, kind: output, shape index: {}]
  %s6 = sld [smem:[#allocation0]]
  $region30: #{mlp_forward.1} parent=0
    _
  %s8 = ssub.s32 1, %s6
  %s9 = scalar_select 0, %s8, %s6
  $region1: #{mlp_forward.1} parent=0
    #allocation2 [shape = 'u8[4096]{0}', space=vmem, size = 0x1000, scoped, tag = 'output window, operand 0, single buffered']
    #allocation3 [shape = 's32[1]{0}', space=sflag, size = 0x4, scoped, tag = 'scoped memory for mlp_forward.1']
    %10 = vsyncpa [#allocation3], 0
    // Predicated region
    $region2: #{mlp_forward.1} parent=1 // pred_check
      _
    $region3: #{mlp_forward.1} parent=1 // pred_check_branch
      %12 = sbr.rel (0) target = $region5
    $region4: #{mlp_forward.1} parent=1 // pred_region
      _
    $region5: #{mlp_forward.1} parent=1 // pred_fallthru
      _
    // Predicated region
    $region6: #{mlp_forward.1} parent=1 // pred_check
      _
    $region7: #{mlp_forward.1} parent=1 // pred_check_branch
      %14 = sbr.rel (0) target = $region9
    $region8: #{mlp_forward.1} parent=1 // pred_region
      _
    $region9: #{mlp_forward.1} parent=1 // pred_fallthru
      _
    // Predicated region
    $region10: #{mlp_forward.1} parent=1 // pred_check
      _
    $region11: #{mlp_forward.1} parent=1 // pred_check_branch
      %16 = sbr.rel (0) target = $region13
    $region12: #{mlp_forward.1} parent=1 // pred_region
      _
    $region13: #{mlp_forward.1} parent=1 // pred_fallthru
      _
    // Predicated region
    $region14: #{mlp_forward.1} parent=1 // pred_check
      _
    $region15: #{mlp_forward.1} parent=1 // pred_check_branch
      %18 = sbr.rel (0) target = $region17
    $region16: #{mlp_forward.1} parent=1 // pred_region
      _
    $region17: #{mlp_forward.1} parent=1 // pred_fallthru
      _
    // Predicated region
    $region18: #{mlp_forward.1} parent=1 // pred_check
      _
    $region19: #{mlp_forward.1} parent=1 // pred_check_branch
      %20 = sbr.rel (0) target = $region21
    $region20: #{mlp_forward.1} parent=1 // pred_region
      _
    $region21: #{mlp_forward.1} parent=1 // pred_fallthru
      _
    %v22 = vld [vmem:[%s0] sm:$0xff]
    %v23 = vld [vmem:[%s0 + $0x8] sm:$0xff]
    %v24 = vld [vmem:[%s0 + $0x10] sm:$0xff]
    %v25 = vld [vmem:[%s0 + $0x18] sm:$0xf]
    %v26 = vld [vmem:[%s1] sm:$0xf]
    %v27 = vld [vmem:[%s1 + $0x4] sm:$0xf]
    %v28 = vld [vmem:[%s1 + $0x8] sm:$0xf]
    %v29 = vld [vmem:[%s1 + $0xc] sm:$0xf]
    %v30 = vld [vmem:[%s1 + $0x10] sm:$0xf]
    %v31 = vld [vmem:[%s1 + $0x14] sm:$0xf]
    %v32 = vld [vmem:[%s1 + $0x18] sm:$0xf]
    %v33 = vld [vmem:[%s1 + $0x1c] sm:$0xf]
    %v34 = vld [vmem:[%s1 + $0x20] sm:$0xf]
    %v35 = vld [vmem:[%s1 + $0x24] sm:$0xf]
    %v36 = vld [vmem:[%s1 + $0x28] sm:$0xf]
    %v37 = vld [vmem:[%s1 + $0x2c] sm:$0xf]
    %v38 = vld [vmem:[%s1 + $0x30] sm:$0xf]
    %v39 = vld [vmem:[%s1 + $0x34] sm:$0xf]
    %v40 = vld [vmem:[%s1 + $0x38] sm:$0xf]
    %v41 = vld [vmem:[%s1 + $0x3c] sm:$0xf]
    %v42 = vld [vmem:[%s1 + $0x40] sm:$0xf]
    %v43 = vld [vmem:[%s1 + $0x44] sm:$0xf]
    %v44 = vld [vmem:[%s1 + $0x48] sm:$0xf]
    %v45 = vld [vmem:[%s1 + $0x4c] sm:$0xf]
    %v46 = vld [vmem:[%s1 + $0x50] sm:$0xf]
    %v47 = vld [vmem:[%s1 + $0x54] sm:$0xf]
    %v48 = vld [vmem:[%s1 + $0x58] sm:$0xf]
    %v49 = vld [vmem:[%s1 + $0x5c] sm:$0xf]
    %v50 = vld [vmem:[%s1 + $0x60] sm:$0xf]
    %v51 = vld [vmem:[%s1 + $0x64] sm:$0xf]
    %v52 = vld [vmem:[%s1 + $0x68] sm:$0xf]
    %v53 = vld [vmem:[%s1 + $0x6c] sm:$0xf]
    %v54 = vld [vmem:[%s1 + $0x70] sm:$0xf]
    %v55 = vld [vmem:[%s1 + $0x74] sm:$0xf]
    %v56 = vld [vmem:[%s1 + $0x78] sm:$0xf]
    %v57 = vld [vmem:[%s1 + $0x7c] sm:$0xf]
    %v58 = vld [vmem:[%s1 + $0x80] sm:$0xf]
    %v59 = vld [vmem:[%s1 + $0x84] sm:$0xf]
    %v60 = vld [vmem:[%s1 + $0x88] sm:$0xf]
    %v61 = vld [vmem:[%s1 + $0x8c] sm:$0xf]
    %v62 = vld [vmem:[%s1 + $0x90] sm:$0xf]
    %v63 = vld [vmem:[%s1 + $0x94] sm:$0xf]
    %v64 = vld [vmem:[%s1 + $0x98] sm:$0xf]
    %v65 = vld [vmem:[%s1 + $0x9c] sm:$0xf]
    %v66 = vld [vmem:[%s1 + $0xa0] sm:$0xf]
    %v67 = vld [vmem:[%s1 + $0xa4] sm:$0xf]
    %v68 = vld [vmem:[%s1 + $0xa8] sm:$0xf]
    %v69 = vld [vmem:[%s1 + $0xac] sm:$0xf]
    %v70 = vld [vmem:[%s1 + $0xb0] sm:$0xf]
    %v71 = vld [vmem:[%s1 + $0xb4] sm:$0xf]
    %v72 = vld [vmem:[%s1 + $0xb8] sm:$0xf]
    %v73 = vld [vmem:[%s1 + $0xbc] sm:$0xf]
    %v74 = vld [vmem:[%s1 + $0xc0] sm:$0xf]
    %v75 = vld [vmem:[%s1 + $0xc4] sm:$0xf]
    %v76 = vld [vmem:[%s1 + $0xc8] sm:$0xf]
    %v77 = vld [vmem:[%s1 + $0xcc] sm:$0xf]
    %v78 = vld [vmem:[%s1 + $0xd0] sm:$0xf]
    %v79 = vld [vmem:[%s1 + $0xd4] sm:$0xf]
    %v80 = vld [vmem:[%s1 + $0xd8] sm:$0xf]
    %v81 = vld [vmem:[%s1 + $0xdc] sm:$0xf]
    %v82 = vld [vmem:[%s1 + $0xe0] sm:$0xf]
    %v83 = vld [vmem:[%s1 + $0xe4] sm:$0xf]
    %v84 = vld [vmem:[%s1 + $0xe8] sm:$0xf]
    %v85 = vld [vmem:[%s1 + $0xec] sm:$0xf]
    %v86 = vld [vmem:[%s1 + $0xf0] sm:$0xf]
    %v87 = vld [vmem:[%s1 + $0xf4] sm:$0xf]
    %v88 = vld [vmem:[%s1 + $0xf8] sm:$0xf]
    %v89 = vld [vmem:[%s1 + $0xfc] sm:$0xf]
    %v90 = vld [vmem:[%s1 + $0x100] sm:$0xf]
    %v91 = vld [vmem:[%s1 + $0x104] sm:$0xf]
    %v92 = vld [vmem:[%s1 + $0x108] sm:$0xf]
    %v93 = vld [vmem:[%s1 + $0x10c] sm:$0xf]
    %v94 = vld [vmem:[%s1 + $0x110] sm:$0xf]
    %v95 = vld [vmem:[%s1 + $0x114] sm:$0xf]
    %v96 = vld [vmem:[%s1 + $0x118] sm:$0xf]
    %v97 = vld [vmem:[%s1 + $0x11c] sm:$0xf]
    %v98 = vld [vmem:[%s1 + $0x120] sm:$0xf]
    %v99 = vld [vmem:[%s1 + $0x124] sm:$0xf]
    %v100 = vld [vmem:[%s1 + $0x128] sm:$0xf]
    %v101 = vld [vmem:[%s1 + $0x12c] sm:$0xf]
    %v102 = vld [vmem:[%s1 + $0x130] sm:$0xf]
    %v103 = vld [vmem:[%s1 + $0x134] sm:$0xf]
    %v104 = vld [vmem:[%s1 + $0x138] sm:$0xf]
    %v105 = vld [vmem:[%s1 + $0x13c] sm:$0xf]
    %v106 = vld [vmem:[%s1 + $0x140] sm:$0xf]
    %v107 = vld [vmem:[%s1 + $0x144] sm:$0xf]
    %v108 = vld [vmem:[%s1 + $0x148] sm:$0xf]
    %v109 = vld [vmem:[%s1 + $0x14c] sm:$0xf]
    %v110 = vld [vmem:[%s1 + $0x150] sm:$0xf]
    %v111 = vld [vmem:[%s1 + $0x154] sm:$0xf]
    %v112 = vld [vmem:[%s1 + $0x158] sm:$0xf]
    %v113 = vld [vmem:[%s1 + $0x15c] sm:$0xf]
    %v114 = vld [vmem:[%s1 + $0x160] sm:$0xf]
    %v115 = vld [vmem:[%s1 + $0x164] sm:$0xf]
    %v116 = vld [vmem:[%s1 + $0x168] sm:$0xf]
    %v117 = vld [vmem:[%s1 + $0x16c] sm:$0xf]
    %v118 = vld [vmem:[%s1 + $0x170] sm:$0xf]
    %v119 = vld [vmem:[%s1 + $0x174] sm:$0xf]
    %v120 = vld [vmem:[%s1 + $0x178] sm:$0xf]
    %v121 = vld [vmem:[%s1 + $0x17c] sm:$0xf]
    %v122 = vld [vmem:[%s1 + $0x180] sm:$0xf]
    %v123 = vld [vmem:[%s1 + $0x184] sm:$0xf]
    %v124 = vld [vmem:[%s1 + $0x188] sm:$0xf]
    %v125 = vld [vmem:[%s1 + $0x18c] sm:$0xf]
    %v126 = vld [vmem:[%s1 + $0x190] sm:$0xf]
    %v127 = vld [vmem:[%s1 + $0x194] sm:$0xf]
    %v128 = vld [vmem:[%s1 + $0x198] sm:$0xf]
    %v129 = vld [vmem:[%s1 + $0x19c] sm:$0xf]
    %v130 = vld [vmem:[%s1 + $0x1a0] sm:$0xf]
    %v131 = vld [vmem:[%s1 + $0x1a4] sm:$0xf]
    %v132 = vld [vmem:[%s1 + $0x1a8] sm:$0xf]
    %v133 = vld [vmem:[%s1 + $0x1ac] sm:$0xf]
    %v134 = vld [vmem:[%s1 + $0x1b0] sm:$0xf]
    %v135 = vld [vmem:[%s1 + $0x1b4] sm:$0xf]
    %v136 = vld [vmem:[%s1 + $0x1b8] sm:$0xf]
    %v137 = vld [vmem:[%s1 + $0x1bc] sm:$0xf]
    %v138 = vld [vmem:[%s2] sm:$0x1]
    %v140 = vlaneseq
    %v141 = vshrl.u32 %v140, 7
    %v142 = vsub.s32 0, %v141
    %v143 = vrot.slane %v138, %v142
    %v149 = vunpack.c.l.b16 %v22
    %v150 = vunpack.c.h.b16 %v22
    %v151 = vunpack.c.l.b16 %v23
    %v152 = vunpack.c.h.b16 %v23
    %v153 = vunpack.c.l.b16 %v24
    %v154 = vunpack.c.h.b16 %v24
    %v155 = vunpack.c.l.b16 %v25
    %v156 = vpack.c.b16 %v149, %v149
    %v157 = vpack.c.b16 %v150, %v150
    %v158 = vpack.c.b16 %v151, %v151
    %v159 = vpack.c.b16 %v152, %v152
    %v160 = vpack.c.b16 %v153, %v153
    %v161 = vpack.c.b16 %v154, %v154
    %v162 = vpack.c.b16 %v155, %v155
    %v282 = vunpack.c.l.b16 %v26
    %v283 = vunpack.c.l.b16 %v27
    %v284 = vunpack.c.l.b16 %v28
    %v285 = vunpack.c.l.b16 %v29
    %v286 = vunpack.c.l.b16 %v30
    %v287 = vunpack.c.l.b16 %v31
    %v288 = vunpack.c.l.b16 %v32
    %v289 = vunpack.c.l.b16 %v33
    %v290 = vunpack.c.l.b16 %v34
    %v291 = vunpack.c.l.b16 %v35
    %v292 = vunpack.c.l.b16 %v36
    %v293 = vunpack.c.l.b16 %v37
    %v294 = vunpack.c.l.b16 %v38
    %v295 = vunpack.c.l.b16 %v39
    %v296 = vunpack.c.l.b16 %v40
    %v297 = vunpack.c.l.b16 %v41
    %v298 = vunpack.c.l.b16 %v42
    %v299 = vunpack.c.l.b16 %v43
    %v300 = vunpack.c.l.b16 %v44
    %v301 = vunpack.c.l.b16 %v45
    %v302 = vunpack.c.l.b16 %v46
    %v303 = vunpack.c.l.b16 %v47
    %v304 = vunpack.c.l.b16 %v48
    %v305 = vunpack.c.l.b16 %v49
    %v306 = vunpack.c.l.b16 %v50
    %v307 = vunpack.c.l.b16 %v51
    %v308 = vunpack.c.l.b16 %v52
    %v309 = vunpack.c.l.b16 %v53
    %v310 = vunpack.c.l.b16 %v54
    %v311 = vunpack.c.l.b16 %v55
    %v312 = vunpack.c.l.b16 %v56
    %v313 = vunpack.c.l.b16 %v57
    %v314 = vunpack.c.l.b16 %v58
    %v315 = vunpack.c.l.b16 %v59
    %v316 = vunpack.c.l.b16 %v60
    %v317 = vunpack.c.l.b16 %v61
    %v318 = vunpack.c.l.b16 %v62
    %v319 = vunpack.c.l.b16 %v63
    %v320 = vunpack.c.l.b16 %v64
    %v321 = vunpack.c.l.b16 %v65
    %v322 = vunpack.c.l.b16 %v66
    %v323 = vunpack.c.l.b16 %v67
    %v324 = vunpack.c.l.b16 %v68
    %v325 = vunpack.c.l.b16 %v69
    %v326 = vunpack.c.l.b16 %v70
    %v327 = vunpack.c.l.b16 %v71
    %v328 = vunpack.c.l.b16 %v72
    %v329 = vunpack.c.l.b16 %v73
    %v330 = vunpack.c.l.b16 %v74
    %v331 = vunpack.c.l.b16 %v75
    %v332 = vunpack.c.l.b16 %v76
    %v333 = vunpack.c.l.b16 %v77
    %v334 = vunpack.c.l.b16 %v78
    %v335 = vunpack.c.l.b16 %v79
    %v336 = vunpack.c.l.b16 %v80
    %v337 = vunpack.c.l.b16 %v81
    %v338 = vunpack.c.l.b16 %v82
    %v339 = vunpack.c.l.b16 %v83
    %v340 = vunpack.c.l.b16 %v84
    %v341 = vunpack.c.l.b16 %v85
    %v342 = vunpack.c.l.b16 %v86
    %v343 = vunpack.c.l.b16 %v87
    %v344 = vunpack.c.l.b16 %v88
    %v345 = vunpack.c.l.b16 %v89
    %v346 = vunpack.c.l.b16 %v90
    %v347 = vunpack.c.l.b16 %v91
    %v348 = vunpack.c.l.b16 %v92
    %v349 = vunpack.c.l.b16 %v93
    %v350 = vunpack.c.l.b16 %v94
    %v351 = vunpack.c.l.b16 %v95
    %v352 = vunpack.c.l.b16 %v96
    %v353 = vunpack.c.l.b16 %v97
    %v354 = vunpack.c.l.b16 %v98
    %v355 = vunpack.c.l.b16 %v99
    %v356 = vunpack.c.l.b16 %v100
    %v357 = vunpack.c.l.b16 %v101
    %v358 = vunpack.c.l.b16 %v102
    %v359 = vunpack.c.l.b16 %v103
    %v360 = vunpack.c.l.b16 %v104
    %v361 = vunpack.c.l.b16 %v105
    %v362 = vunpack.c.l.b16 %v106
    %v363 = vunpack.c.l.b16 %v107
    %v364 = vunpack.c.l.b16 %v108
    %v365 = vunpack.c.l.b16 %v109
    %v366 = vunpack.c.l.b16 %v110
    %v367 = vunpack.c.l.b16 %v111
    %v368 = vunpack.c.l.b16 %v112
    %v369 = vunpack.c.l.b16 %v113
    %v370 = vunpack.c.l.b16 %v114
    %v371 = vunpack.c.l.b16 %v115
    %v372 = vunpack.c.l.b16 %v116
    %v373 = vunpack.c.l.b16 %v117
    %v374 = vunpack.c.l.b16 %v118
    %v375 = vunpack.c.l.b16 %v119
    %v376 = vunpack.c.l.b16 %v120
    %v377 = vunpack.c.l.b16 %v121
    %v378 = vunpack.c.l.b16 %v122
    %v379 = vunpack.c.l.b16 %v123
    %v380 = vunpack.c.l.b16 %v124
    %v381 = vunpack.c.l.b16 %v125
    %v382 = vunpack.c.l.b16 %v126
    %v383 = vunpack.c.l.b16 %v127
    %v384 = vunpack.c.l.b16 %v128
    %v385 = vunpack.c.l.b16 %v129
    %v386 = vunpack.c.l.b16 %v130
    %v387 = vunpack.c.l.b16 %v131
    %v388 = vunpack.c.l.b16 %v132
    %v389 = vunpack.c.l.b16 %v133
    %v390 = vunpack.c.l.b16 %v134
    %v391 = vunpack.c.l.b16 %v135
    %v392 = vunpack.c.l.b16 %v136
    %v393 = vunpack.c.l.b16 %v137
    %v394 = vpack.c.b16 %v283, %v282
    %v395 = vpack.c.b16 %v285, %v284
    %v396 = vpack.c.b16 %v287, %v286
    %v397 = vpack.c.b16 %v289, %v288
    %v398 = vpack.c.b16 %v291, %v290
    %v399 = vpack.c.b16 %v293, %v292
    %v400 = vpack.c.b16 %v295, %v294
    %v401 = vpack.c.b16 %v297, %v296
    %v402 = vpack.c.b16 %v299, %v298
    %v403 = vpack.c.b16 %v301, %v300
    %v404 = vpack.c.b16 %v303, %v302
    %v405 = vpack.c.b16 %v305, %v304
    %v406 = vpack.c.b16 %v307, %v306
    %v407 = vpack.c.b16 %v309, %v308
    %v408 = vpack.c.b16 %v311, %v310
    %v409 = vpack.c.b16 %v313, %v312
    %v410 = vpack.c.b16 %v315, %v314
    %v411 = vpack.c.b16 %v317, %v316
    %v412 = vpack.c.b16 %v319, %v318
    %v413 = vpack.c.b16 %v321, %v320
    %v414 = vpack.c.b16 %v323, %v322
    %v415 = vpack.c.b16 %v325, %v324
    %v416 = vpack.c.b16 %v327, %v326
    %v417 = vpack.c.b16 %v329, %v328
    %v418 = vpack.c.b16 %v331, %v330
    %v419 = vpack.c.b16 %v333, %v332
    %v420 = vpack.c.b16 %v335, %v334
    %v421 = vpack.c.b16 %v337, %v336
    %v422 = vpack.c.b16 %v339, %v338
    %v423 = vpack.c.b16 %v341, %v340
    %v424 = vpack.c.b16 %v343, %v342
    %v425 = vpack.c.b16 %v345, %v344
    %v426 = vpack.c.b16 %v347, %v346
    %v427 = vpack.c.b16 %v349, %v348
    %v428 = vpack.c.b16 %v351, %v350
    %v429 = vpack.c.b16 %v353, %v352
    %v430 = vpack.c.b16 %v355, %v354
    %v431 = vpack.c.b16 %v357, %v356
    %v432 = vpack.c.b16 %v359, %v358
    %v433 = vpack.c.b16 %v361, %v360
    %v434 = vpack.c.b16 %v363, %v362
    %v435 = vpack.c.b16 %v365, %v364
    %v436 = vpack.c.b16 %v367, %v366
    %v437 = vpack.c.b16 %v369, %v368
    %v438 = vpack.c.b16 %v371, %v370
    %v439 = vpack.c.b16 %v373, %v372
    %v440 = vpack.c.b16 %v375, %v374
    %v441 = vpack.c.b16 %v377, %v376
    %v442 = vpack.c.b16 %v379, %v378
    %v443 = vpack.c.b16 %v381, %v380
    %v444 = vpack.c.b16 %v383, %v382
    %v445 = vpack.c.b16 %v385, %v384
    %v446 = vpack.c.b16 %v387, %v386
    %v447 = vpack.c.b16 %v389, %v388
    %v448 = vpack.c.b16 %v391, %v390
    %v449 = vpack.c.b16 %v393, %v392
    %506 = vmatprep.subr.bf16.mxu0 0
    %507 = vmatpush1.bf16.msra.mxu0 %v394
    %508 = vmatprep.subr.bf16.mxu0 0
    %509 = vmatpush1.bf16.msra.mxu0 %v395
    %510 = vmatprep.subr.bf16.mxu0 0
    %511 = vmatpush1.bf16.msra.mxu0 %v396
    %512 = vmatprep.subr.bf16.mxu0 0
    %513 = vmatpush1.bf16.msra.mxu0 %v397
    %514 = vmatprep.subr.bf16.mxu0 0
    %515 = vmatpush1.bf16.msra.mxu0 %v398
    %516 = vmatprep.subr.bf16.mxu0 0
    %517 = vmatpush1.bf16.msra.mxu0 %v399
    %518 = vmatprep.subr.bf16.mxu0 0
    %519 = vmatpush1.bf16.msra.mxu0 %v400
    %520 = vmatprep.subr.bf16.mxu0 0
    %521 = vmatpush1.bf16.msra.mxu0 %v401
    %522 = vmatprep.subr.bf16.mxu0 0
    %523 = vmatpush1.bf16.msra.mxu0 %v402
    %524 = vmatprep.subr.bf16.mxu0 0
    %525 = vmatpush1.bf16.msra.mxu0 %v403
    %526 = vmatprep.subr.bf16.mxu0 0
    %527 = vmatpush1.bf16.msra.mxu0 %v404
    %528 = vmatprep.subr.bf16.mxu0 0
    %529 = vmatpush1.bf16.msra.mxu0 %v405
    %530 = vmatprep.subr.bf16.mxu0 0
    %531 = vmatpush1.bf16.msra.mxu0 %v406
    %532 = vmatprep.subr.bf16.mxu0 0
    %533 = vmatpush1.bf16.msra.mxu0 %v407
    %534 = vmatprep.subr.bf16.mxu0 0
    %535 = vmatpush1.bf16.msra.mxu0 %v408
    %536 = vmatprep.subr.bf16.mxu0 0
    %537 = vmatpush1.bf16.msra.mxu0 %v409
    %538 = vmatprep.mubr.bf16.mxu0 %v157
    %539 = vmatmul.mubr.bf16.gmra.mrb[0].mxu0 %v156
    %v540 = vpop.f32.mrb[0].mxu0
    %v541 = vadd.f32 %v143, %v540
    %v542 = vpop.f32.mrb[0].mxu0
    %v543 = vpop.f32.mrb[0].mxu0
    %v544 = vpop.f32.mrb[0].mxu0
    %545 = vdwg.mxu0
    %546 = vmatprep.subr.bf16.mxu0 0
    %547 = vmatpush1.bf16.msra.mxu0 %v410
    %548 = vmatprep.subr.bf16.mxu0 0
    %549 = vmatpush1.bf16.msra.mxu0 %v411
    %550 = vmatprep.subr.bf16.mxu0 0
    %551 = vmatpush1.bf16.msra.mxu0 %v412
    %552 = vmatprep.subr.bf16.mxu0 0
    %553 = vmatpush1.bf16.msra.mxu0 %v413
    %554 = vmatprep.subr.bf16.mxu0 0
    %555 = vmatpush1.bf16.msra.mxu0 %v414
    %556 = vmatprep.subr.bf16.mxu0 0
    %557 = vmatpush1.bf16.msra.mxu0 %v415
    %558 = vmatprep.subr.bf16.mxu0 0
    %559 = vmatpush1.bf16.msra.mxu0 %v416
    %560 = vmatprep.subr.bf16.mxu0 0
    %561 = vmatpush1.bf16.msra.mxu0 %v417
    %562 = vmatprep.subr.bf16.mxu0 0
    %563 = vmatpush1.bf16.msra.mxu0 %v418
    %564 = vmatprep.subr.bf16.mxu0 0
    %565 = vmatpush1.bf16.msra.mxu0 %v419
    %566 = vmatprep.subr.bf16.mxu0 0
    %567 = vmatpush1.bf16.msra.mxu0 %v420
    %568 = vmatprep.subr.bf16.mxu0 0
    %569 = vmatpush1.bf16.msra.mxu0 %v421
    %570 = vmatprep.subr.bf16.mxu0 0
    %571 = vmatpush1.bf16.msra.mxu0 %v422
    %572 = vmatprep.subr.bf16.mxu0 0
    %573 = vmatpush1.bf16.msra.mxu0 %v423
    %574 = vmatprep.subr.bf16.mxu0 0
    %575 = vmatpush1.bf16.msra.mxu0 %v424
    %576 = vmatprep.subr.bf16.mxu0 0
    %577 = vmatpush1.bf16.msra.mxu0 %v425
    %578 = vmatprep.mubr.bf16.mxu0 %v159
    %579 = vmatmul.mubr.bf16.gmra.mrb[0].mxu0 %v158
    %v580 = vpop.f32.mrb[0].mxu0
    %v581 = vadd.f32 %v541, %v580
    %v582 = vpop.f32.mrb[0].mxu0
    %v583 = vpop.f32.mrb[0].mxu0
    %v584 = vpop.f32.mrb[0].mxu0
    %585 = vdwg.mxu0
    %586 = vmatprep.subr.bf16.mxu0 0
    %587 = vmatpush1.bf16.msra.mxu0 %v426
    %588 = vmatprep.subr.bf16.mxu0 0
    %589 = vmatpush1.bf16.msra.mxu0 %v427
    %590 = vmatprep.subr.bf16.mxu0 0
    %591 = vmatpush1.bf16.msra.mxu0 %v428
    %592 = vmatprep.subr.bf16.mxu0 0
    %593 = vmatpush1.bf16.msra.mxu0 %v429
    %594 = vmatprep.subr.bf16.mxu0 0
    %595 = vmatpush1.bf16.msra.mxu0 %v430
    %596 = vmatprep.subr.bf16.mxu0 0
    %597 = vmatpush1.bf16.msra.mxu0 %v431
    %598 = vmatprep.subr.bf16.mxu0 0
    %599 = vmatpush1.bf16.msra.mxu0 %v432
    %600 = vmatprep.subr.bf16.mxu0 0
    %601 = vmatpush1.bf16.msra.mxu0 %v433
    %602 = vmatprep.subr.bf16.mxu0 0
    %603 = vmatpush1.bf16.msra.mxu0 %v434
    %604 = vmatprep.subr.bf16.mxu0 0
    %605 = vmatpush1.bf16.msra.mxu0 %v435
    %606 = vmatprep.subr.bf16.mxu0 0
    %607 = vmatpush1.bf16.msra.mxu0 %v436
    %608 = vmatprep.subr.bf16.mxu0 0
    %609 = vmatpush1.bf16.msra.mxu0 %v437
    %610 = vmatprep.subr.bf16.mxu0 0
    %611 = vmatpush1.bf16.msra.mxu0 %v438
    %612 = vmatprep.subr.bf16.mxu0 0
    %613 = vmatpush1.bf16.msra.mxu0 %v439
    %614 = vmatprep.subr.bf16.mxu0 0
    %615 = vmatpush1.bf16.msra.mxu0 %v440
    %616 = vmatprep.subr.bf16.mxu0 0
    %617 = vmatpush1.bf16.msra.mxu0 %v441
    %618 = vmatprep.mubr.bf16.mxu0 %v161
    %619 = vmatmul.mubr.bf16.gmra.mrb[0].mxu0 %v160
    %v620 = vpop.f32.mrb[0].mxu0
    %v621 = vadd.f32 %v581, %v620
    %v622 = vpop.f32.mrb[0].mxu0
    %v623 = vpop.f32.mrb[0].mxu0
    %v624 = vpop.f32.mrb[0].mxu0
    %625 = vdwg.mxu0
    %626 = vmatprep.subr.bf16.mxu0 0
    %627 = vmatpush1.bf16.msra.mxu0 %v442
    %628 = vmatprep.subr.bf16.mxu0 0
    %629 = vmatpush1.bf16.msra.mxu0 %v443
    %630 = vmatprep.subr.bf16.mxu0 0
    %631 = vmatpush1.bf16.msra.mxu0 %v444
    %632 = vmatprep.subr.bf16.mxu0 0
    %633 = vmatpush1.bf16.msra.mxu0 %v445
    %634 = vmatprep.subr.bf16.mxu0 0
    %635 = vmatpush1.bf16.msra.mxu0 %v446
    %636 = vmatprep.subr.bf16.mxu0 0
    %637 = vmatpush1.bf16.msra.mxu0 %v447
    %638 = vmatprep.subr.bf16.mxu0 0
    %639 = vmatpush1.bf16.msra.mxu0 %v448
    %640 = vmatprep.subr.bf16.mxu0 0
    %641 = vmatpush1.bf16.msra.mxu0 %v449
    %642 = vmatprep.subr.bf16.mxu0 0
    %643 = vmatpush1.bf16.msra.mxu0 0
    %644 = vmatprep.subr.bf16.mxu0 0
    %645 = vmatpush1.bf16.msra.mxu0 0
    %646 = vmatprep.subr.bf16.mxu0 0
    %647 = vmatpush1.bf16.msra.mxu0 0
    %648 = vmatprep.subr.bf16.mxu0 0
    %649 = vmatpush1.bf16.msra.mxu0 0
    %650 = vmatprep.subr.bf16.mxu0 0
    %651 = vmatpush1.bf16.msra.mxu0 0
    %652 = vmatprep.subr.bf16.mxu0 0
    %653 = vmatpush1.bf16.msra.mxu0 0
    %654 = vmatprep.subr.bf16.mxu0 0
    %655 = vmatpush1.bf16.msra.mxu0 0
    %656 = vmatprep.subr.bf16.mxu0 0
    %657 = vmatpush1.bf16.msra.mxu0 0
    %658 = vmatprep.mubr.bf16.mxu0 0
    %659 = vmatmul.mubr.bf16.gmra.mrb[0].mxu0 %v162
    %v660 = vpop.f32.mrb[0].mxu0
    %v661 = vadd.f32 %v621, %v660
    %v662 = vpop.f32.mrb[0].mxu0
    %v663 = vpop.f32.mrb[0].mxu0
    %v664 = vpop.f32.mrb[0].mxu0
    %665 = vdwg.mxu0
    %v666 = vmax.f32 %v661, 0.0
    %v667 = vpack.c.bf16 %v666, %v666
    %v668 = vld [vmem:[%s3] sm:$0xf]
    %v669 = vld [vmem:[%s3 + $0x4] sm:$0xf]
    %v670 = vld [vmem:[%s3 + $0x8] sm:$0xf]
    %v671 = vld [vmem:[%s3 + $0xc] sm:$0xf]
    %v672 = vld [vmem:[%s3 + $0x10] sm:$0xf]
    %v673 = vld [vmem:[%s3 + $0x14] sm:$0xf]
    %v674 = vld [vmem:[%s3 + $0x18] sm:$0xf]
    %v675 = vld [vmem:[%s3 + $0x1c] sm:$0xf]
    %v676 = vld [vmem:[%s3 + $0x20] sm:$0xf]
    %v677 = vld [vmem:[%s3 + $0x24] sm:$0xf]
    %v678 = vld [vmem:[%s3 + $0x28] sm:$0xf]
    %v679 = vld [vmem:[%s3 + $0x2c] sm:$0xf]
    %v680 = vld [vmem:[%s3 + $0x30] sm:$0xf]
    %v681 = vld [vmem:[%s3 + $0x34] sm:$0xf]
    %v682 = vld [vmem:[%s3 + $0x38] sm:$0xf]
    %v683 = vld [vmem:[%s3 + $0x3c] sm:$0xf]
    %v684 = vld [vmem:[%s4] sm:$0x1]
    %v686 = vlaneseq
    %v687 = vshrl.u32 %v686, 7
    %v688 = vsub.s32 0, %v687
    %v689 = vrot.slane %v684, %v688
    %v707 = vunpack.c.l.b16 %v668
    %v708 = vunpack.c.l.b16 %v669
    %v709 = vunpack.c.l.b16 %v670
    %v710 = vunpack.c.l.b16 %v671
    %v711 = vunpack.c.l.b16 %v672
    %v712 = vunpack.c.l.b16 %v673
    %v713 = vunpack.c.l.b16 %v674
    %v714 = vunpack.c.l.b16 %v675
    %v715 = vunpack.c.l.b16 %v676
    %v716 = vunpack.c.l.b16 %v677
    %v717 = vunpack.c.l.b16 %v678
    %v718 = vunpack.c.l.b16 %v679
    %v719 = vunpack.c.l.b16 %v680
    %v720 = vunpack.c.l.b16 %v681
    %v721 = vunpack.c.l.b16 %v682
    %v722 = vunpack.c.l.b16 %v683
    %v723 = vpack.c.b16 %v708, %v707
    %v724 = vpack.c.b16 %v710, %v709
    %v725 = vpack.c.b16 %v712, %v711
    %v726 = vpack.c.b16 %v714, %v713
    %v727 = vpack.c.b16 %v716, %v715
    %v728 = vpack.c.b16 %v718, %v717
    %v729 = vpack.c.b16 %v720, %v719
    %v730 = vpack.c.b16 %v722, %v721
    %739 = vmatprep.subr.bf16.mxu0 0
    %740 = vmatpush1.bf16.msra.mxu0 %v723
    %741 = vmatprep.subr.bf16.mxu0 0
    %742 = vmatpush1.bf16.msra.mxu0 %v724
    %743 = vmatprep.subr.bf16.mxu0 0
    %744 = vmatpush1.bf16.msra.mxu0 %v725
    %745 = vmatprep.subr.bf16.mxu0 0
    %746 = vmatpush1.bf16.msra.mxu0 %v726
    %747 = vmatprep.subr.bf16.mxu0 0
    %748 = vmatpush1.bf16.msra.mxu0 %v727
    %749 = vmatprep.subr.bf16.mxu0 0
    %750 = vmatpush1.bf16.msra.mxu0 %v728
    %751 = vmatprep.subr.bf16.mxu0 0
    %752 = vmatpush1.bf16.msra.mxu0 %v729
    %753 = vmatprep.subr.bf16.mxu0 0
    %754 = vmatpush1.bf16.msra.mxu0 %v730
    %755 = vmatprep.subr.bf16.mxu0 0
    %756 = vmatpush1.bf16.msra.mxu0 0
    %757 = vmatprep.subr.bf16.mxu0 0
    %758 = vmatpush1.bf16.msra.mxu0 0
    %759 = vmatprep.subr.bf16.mxu0 0
    %760 = vmatpush1.bf16.msra.mxu0 0
    %761 = vmatprep.subr.bf16.mxu0 0
    %762 = vmatpush1.bf16.msra.mxu0 0
    %763 = vmatprep.subr.bf16.mxu0 0
    %764 = vmatpush1.bf16.msra.mxu0 0
    %765 = vmatprep.subr.bf16.mxu0 0
    %766 = vmatpush1.bf16.msra.mxu0 0
    %767 = vmatprep.subr.bf16.mxu0 0
    %768 = vmatpush1.bf16.msra.mxu0 0
    %769 = vmatprep.subr.bf16.mxu0 0
    %770 = vmatpush1.bf16.msra.mxu0 0
    %771 = vmatprep.mubr.bf16.mxu0 0
    %772 = vmatmul.mubr.bf16.gmra.mrb[0].mxu0 %v667
    %v773 = vpop.f32.mrb[0].mxu0
    %v774 = vadd.f32 %v689, %v773
    %v775 = vpop.f32.mrb[0].mxu0
    %v776 = vpop.f32.mrb[0].mxu0
    %v777 = vpop.f32.mrb[0].mxu0
    %778 = vdwg.mxu0
    %779 = vst [vmem:[#allocation2] sm:$0xff] %v774
    // Predicated region
    $region22: #{mlp_forward.1} parent=1 // pred_check
      _
    $region23: #{mlp_forward.1} parent=1 // pred_check_branch
      %781 = sbr.rel (0) target = $region25
    $region24: #{mlp_forward.1} parent=1 // pred_region
      %s783 = ssub.s32 128, 128
      %784 = vsyncadd [#allocation3], %s783
      %s786 = sshll.u32 [#allocation2], 4
      %s787 = int_to_ptr.vmem [resolvable:$true] %s786
      %789 = dma.vmem_to_hbm [thread:$0]  %s787, 128, %s5, [#allocation3]
    $region25: #{mlp_forward.1} parent=1 // pred_fallthru
      _
    // Predicated region
    $region26: #{mlp_forward.1} parent=1 // pred_check
      _
    $region27: #{mlp_forward.1} parent=1 // pred_check_branch
      %791 = sbr.rel (0) target = $region29
    $region28: #{mlp_forward.1} parent=1 // pred_region
      %792 = dma.done [#allocation3], 128
    $region29: #{mlp_forward.1} parent=1 // pred_fallthru
      _
    %793 = vsyncpa [#allocation3], 1

</llo_original>
